<compile_context>
chip_gen: v5e
topology: v5e:2x2
jax: 0.10.0
libtpu: 0.0.40
codegen_flags: <defaults>
</compile_context>

<pallas_src>
import jax
import jax.numpy as jnp
from jax.experimental import pallas as pl
from jax.experimental.pallas import tpu as pltpu


def _round_up(x, m):
    return ((x + m - 1) // m) * m


# --------------------------------------------------------------------------- #
# Kernel
# --------------------------------------------------------------------------- #
def _two_mlp_head_kernel(x_ref, w6_ref, b6_ref, w7_ref, b7_ref, o_ref):
    k = pl.program_id(1)

    @pl.when(k == 0)
    def _():
        o_ref[...] = jnp.zeros_like(o_ref)

    # fc6 partial product: cast the f32 x tile to bf16 inside the kernel
    # (no standalone convert/pad pass in HBM), accumulate in f32 directly
    # into the VMEM-resident output block.
    o_ref[...] += jnp.dot(x_ref[...].astype(jnp.bfloat16), w6_ref[...],
                          preferred_element_type=jnp.float32)

    @pl.when(k == pl.num_programs(1) - 1)
    def _():
        # fc6 bias + ReLU, then fc7 (+bias, ReLU) fused on the same row tile.
        h = jnp.maximum(o_ref[...] + b6_ref[...], 0.0)
        h2 = jnp.dot(h.astype(jnp.bfloat16), w7_ref[...],
                     preferred_element_type=jnp.float32)
        o_ref[...] = jnp.maximum(h2 + b7_ref[...], 0.0)


# --------------------------------------------------------------------------- #
# Tiling plan + one-time parameter prep
# --------------------------------------------------------------------------- #
def plan_tiles(n, d, *, tile_m_max=512, tile_k_max=1792):
    """Pick (tile_m, tile_k, d_pad).

    tile_k: multiple of 128, preferably an exact divisor of the 128-aligned D
    (e.g. D=12544 -> 1792) so no K padding / zero tail slab is needed.
    tile_m: multiple of 16 (bf16 sublane packing) chosen to minimize padded-row
    waste; if a single m-tile suffices, use the exact full dim (no waste).
    """
    d_aligned = _round_up(d, 128)
    tk_cap = max(128, min((tile_k_max // 128) * 128, d_aligned))
    tile_k = tk_cap
    for t in range(tk_cap, 0, -128):
        if d_aligned % t == 0:
            if t * 2 >= tk_cap:          # accept only if not drastically smaller
                tile_k = t
            break
    d_pad = _round_up(d_aligned, tile_k)

    tile_m_max = max(16, (tile_m_max // 16) * 16)
    num_m = pl.cdiv(n, tile_m_max)
    if num_m == 1:
        tile_m = n                        # full-dim block: exact & layout-legal
    else:
        tile_m = _round_up(pl.cdiv(n, num_m), 16)
    return tile_m, tile_k, d_pad


def prepare_two_mlp_head_params(w6, b6, w7, b7, d_pad):
    """One-time prep of static parameters (hoist out of the per-call hot path):
    bf16 weight cast + K-padding of W6."""
    d, r = w6.shape
    w6_bf = w6.astype(jnp.bfloat16)
    if d_pad != d:
        w6_bf = jnp.pad(w6_bf, ((0, d_pad - d), (0, 0)))
    w7_bf = w7.astype(jnp.bfloat16)
    b6_2d = b6.astype(jnp.float32).reshape(1, r)
    b7_2d = b7.astype(jnp.float32).reshape(1, r)
    return w6_bf, b6_2d, w7_bf, b7_2d


# --------------------------------------------------------------------------- #
# pallas_call wrapper
# --------------------------------------------------------------------------- #
def two_mlp_head_prepared(x, w6_bf, b6_2d, w7_bf, b7_2d, *, tile_m, tile_k):
    n = x.shape[0]
    x2d = x.reshape(n, -1)                      # torch.flatten(start_dim=1)
    d = x2d.shape[1]
    d_pad = w6_bf.shape[0]
    r = w7_bf.shape[1]

    # Only the rare non-aligned-D case needs an x pad; partial row (M) blocks
    # are handled by Pallas boundary-block masking, so x is never copied for M.
    if d_pad != d:
        x2d = jnp.pad(x2d, ((0, 0), (0, d_pad - d)))

    grid = (pl.cdiv(n, tile_m), d_pad // tile_k)
    num_m = grid[0]
    x_isize = jnp.dtype(x2d.dtype).itemsize

    cost = pl.CostEstimate(
        flops=2 * n * d_pad * r + 2 * n * r * r,
        transcendentals=0,
        bytes_accessed=(x2d.size * x_isize            # x read once
                        + num_m * w6_bf.size * 2      # W6 streamed once per m-tile
                        + w7_bf.size * 2 + 2 * r * 4  # resident W7 + biases, once
                        + n * r * 4))                 # f32 output write

    # VMEM budget: double-buffered x slab + W6 slab, resident W7/biases, f32
    # output/accumulator block; add headroom and set the limit explicitly so
    # large tiles don't trip the 16/32 MiB default scoped limit.
    vmem_est = (2 * tile_m * tile_k * x_isize + 2 * tile_k * r * 2
                + 2 * r * r * 2 + 4 * r * 4 + 2 * tile_m * r * 4)
    vmem_limit = int(min(100 << 20, max(16 << 20, int(vmem_est * 1.4))))

    out = pl.pallas_call(
        _two_mlp_head_kernel,
        out_shape=jax.ShapeDtypeStruct((n, r), jnp.float32),
        grid_spec=pltpu.PrefetchScalarGridSpec(
            num_scalar_prefetch=0,
            grid=grid,
            in_specs=[
                pl.BlockSpec((tile_m, tile_k), lambda m, k: (m, k)),  # x slab
                pl.BlockSpec((tile_k, r), lambda m, k: (k, 0)),       # W6 slab
                pl.BlockSpec((1, r), lambda m, k: (0, 0)),            # b6 (resident)
                pl.BlockSpec((r, r), lambda m, k: (0, 0)),            # W7 (resident)
                pl.BlockSpec((1, r), lambda m, k: (0, 0)),            # b7 (resident)
            ],
            out_specs=pl.BlockSpec((tile_m, r), lambda m, k: (m, 0)),
        ),
        compiler_params=pltpu.CompilerParams(
            dimension_semantics=("parallel", "arbitrary"),
            vmem_limit_bytes=vmem_limit),
        cost_estimate=cost,
    )(x2d, w6_bf, b6_2d, w7_bf, b7_2d)
    return out


def two_mlp_head(x, w6, b6, w7, b7, *, tile_m_max=512, tile_k_max=1792):
    """Convenience one-shot wrapper (params prepared per call).
    For repeated calls, hoist prepare_two_mlp_head_params() out of the loop."""
    n = x.shape[0]
    d = 1
    for s in x.shape[1:]:
        d *= s
    tile_m, tile_k, d_pad = plan_tiles(n, d, tile_m_max=tile_m_max,
                                       tile_k_max=tile_k_max)
    params = prepare_two_mlp_head_params(w6, b6, w7, b7, d_pad)
    return two_mlp_head_prepared(x, *params, tile_m=tile_m, tile_k=tile_k)


# --------------------------------------------------------------------------- #
# References
# --------------------------------------------------------------------------- #
def reference_f32(x, w6, b6, w7, b7):
    x2d = x.reshape(x.shape[0], -1)
    h = jnp.maximum(x2d @ w6 + b6, 0.0)
    return jnp.maximum(h @ w7 + b7, 0.0)


def reference_mixed(x, w6, b6, w7, b7):
    # Same mixed-precision recipe as the kernel (bf16 operands, f32 accumulate).
    x2d = x.reshape(x.shape[0], -1)
    h = jnp.dot(x2d.astype(jnp.bfloat16), w6.astype(jnp.bfloat16),
                preferred_element_type=jnp.float32) + b6
    h = jnp.maximum(h, 0.0)
    h2 = jnp.dot(h.astype(jnp.bfloat16), w7.astype(jnp.bfloat16),
                 preferred_element_type=jnp.float32) + b7
    return jnp.maximum(h2, 0.0)


if __name__ == "__main__":
    # Small shapes consistent with the module: N proposals of ROI-pooled
    # (C, H, W) features, in_channels = C*H*W, representation_size = R.
    # N=12 exercises the non-aligned row path; tile caps (16, 128) force a
    # 2-step K reduction grid so the accumulator / pl.when phases are tested.
    N, C, H, W = 12, 4, 8, 8          # in_channels = 256
    R = 128                           # representation_size

    key = jax.random.PRNGKey(0)
    kx, k6w, k6b, k7w, k7b = jax.random.split(key, 5)

    x = jax.random.normal(kx, (N, C, H, W), dtype=jnp.float32)
    in_channels = C * H * W

    # PyTorch-Linear-like fan-in uniform init, stored pre-transposed (in, out).
    s6 = 1.0 / jnp.sqrt(in_channels)
    s7 = 1.0 / jnp.sqrt(R)
    w6 = jax.random.uniform(k6w, (in_channels, R), jnp.float32, -s6, s6)
    b6 = jax.random.uniform(k6b, (R,), jnp.float32, -s6, s6)
    w7 = jax.random.uniform(k7w, (R, R), jnp.float32, -s7, s7)
    b7 = jax.random.uniform(k7b, (R,), jnp.float32, -s7, s7)

    # --- path 1: prepared params (hoisted weight prep), multi-step K grid ---
    tile_m, tile_k, d_pad = plan_tiles(N, in_channels,
                                       tile_m_max=16, tile_k_max=128)
    params = prepare_two_mlp_head_params(w6, b6, w7, b7, d_pad)
    out = two_mlp_head_prepared(x, *params, tile_m=tile_m, tile_k=tile_k)
    out = jax.block_until_ready(out)
    assert out.shape == (N, R)

    ref_mx = reference_mixed(x, w6, b6, w7, b7)   # same mixed-precision recipe
    ref32 = reference_f32(x, w6, b6, w7, b7)      # pure-f32 PyTorch math
    assert jnp.allclose(out, ref_mx, atol=2e-3, rtol=2e-3)
    assert jnp.allclose(out, ref32, atol=5e-2, rtol=5e-2)

    # --- path 2: convenience wrapper with production-style default tiles ---
    out2 = jax.block_until_ready(two_mlp_head(x, w6, b6, w7, b7))
    assert out2.shape == (N, R)
    assert jnp.allclose(out2, ref_mx, atol=2e-3, rtol=2e-3)
    assert jnp.allclose(out2, ref32, atol=5e-2, rtol=5e-2)

    print("KERNEL_OK")
</pallas_src>

<mosaic_0001>
module attributes {stable_mosaic.version = 11 : i64} {
  func.func @_two_mlp_head_kernel(%arg0: i32, %arg1: i32, %arg2: memref<12x128xf32, #tpu.memory_space<vmem>>, %arg3: memref<128x128xbf16, #tpu.memory_space<vmem>>, %arg4: memref<1x128xf32, #tpu.memory_space<vmem>>, %arg5: memref<128x128xbf16, #tpu.memory_space<vmem>>, %arg6: memref<1x128xf32, #tpu.memory_space<vmem>>, %arg7: memref<12x128xf32, #tpu.memory_space<vmem>>) attributes {dimension_semantics = [#tpu.dimension_semantics<parallel>, #tpu.dimension_semantics<arbitrary>], iteration_bounds = array<i64: 1, 2>, scalar_prefetch = 0 : i64, scratch_operands = 0 : i64, tpu.core_type = #tpu.core_type<tc>, window_params = [{transform_indices = @transform_0, window_bounds = array<i64: 12, 128>}, {transform_indices = @transform_1, window_bounds = array<i64: 128, 128>}, {pipeline_mode = #tpu.pipeline_mode<synchronous>, transform_indices = @transform_2, window_bounds = array<i64: 1, 128>}, {pipeline_mode = #tpu.pipeline_mode<synchronous>, transform_indices = @transform_3, window_bounds = array<i64: 128, 128>}, {pipeline_mode = #tpu.pipeline_mode<synchronous>, transform_indices = @transform_4, window_bounds = array<i64: 1, 128>}, {transform_indices = @transform_5, window_bounds = array<i64: 12, 128>}]} {
    %c0_i32 = arith.constant 0 : i32
    %0 = arith.cmpi eq, %arg1, %c0_i32 : i32
    %1 = arith.extui %0 : i1 to i32
    %c0_i32_0 = arith.constant 0 : i32
    %2 = arith.cmpi ne, %1, %c0_i32_0 : i32
    scf.if %2 {
      %cst_9 = arith.constant 0.000000e+00 : f32
      %13 = vector.broadcast %cst_9 : f32 to vector<12x128xf32>
      %c0_10 = arith.constant 0 : index
      %c0_11 = arith.constant 0 : index
      %14 = vector.load %arg7[%c0_10, %c0_11] : memref<12x128xf32, #tpu.memory_space<vmem>>, vector<12x128xf32>
      tpu.vector_store %arg7[%c0_10, %c0_11], %13 {strides = array<i32>} : memref<12x128xf32, #tpu.memory_space<vmem>>, vector<12x128xf32>,
    } else {
    }
    %c0 = arith.constant 0 : index
    %c0_1 = arith.constant 0 : index
    %3 = vector.load %arg7[%c0, %c0_1] : memref<12x128xf32, #tpu.memory_space<vmem>>, vector<12x128xf32>
    %c0_2 = arith.constant 0 : index
    %c0_3 = arith.constant 0 : index
    %4 = vector.load %arg2[%c0_2, %c0_3] : memref<12x128xf32, #tpu.memory_space<vmem>>, vector<12x128xf32>
    %5 = arith.truncf %4 : vector<12x128xf32> to vector<12x128xbf16>
    %c0_4 = arith.constant 0 : index
    %c0_5 = arith.constant 0 : index
    %6 = vector.load %arg3[%c0_4, %c0_5] : memref<128x128xbf16, #tpu.memory_space<vmem>>, vector<128x128xbf16>
    %cst = arith.constant dense<0.000000e+00> : vector<12x128xf32>
    %7 = tpu.matmul %5, %6, %cst {dimension_numbers = #tpu.dot_dimension_numbers<[1], [0], [0], [1], [0, 0, 1, 1], [], []>} : vector<12x128xbf16>, vector<128x128xbf16>, vector<12x128xf32> -> vector<12x128xf32>
    %8 = arith.addf %3, %7 : vector<12x128xf32>
    %c0_6 = arith.constant 0 : index
    %c0_7 = arith.constant 0 : index
    %9 = vector.load %arg7[%c0_6, %c0_7] : memref<12x128xf32, #tpu.memory_space<vmem>>, vector<12x128xf32>
    tpu.vector_store %arg7[%c0_6, %c0_7], %8 {strides = array<i32>} : memref<12x128xf32, #tpu.memory_space<vmem>>, vector<12x128xf32>,
    %c1_i32 = arith.constant 1 : i32
    %10 = arith.cmpi eq, %arg1, %c1_i32 : i32
    %11 = arith.extui %10 : i1 to i32
    %c0_i32_8 = arith.constant 0 : i32
    %12 = arith.cmpi ne, %11, %c0_i32_8 : i32
    scf.if %12 {
      %c0_9 = arith.constant 0 : index
      %c0_10 = arith.constant 0 : index
      %13 = vector.load %arg7[%c0_9, %c0_10] : memref<12x128xf32, #tpu.memory_space<vmem>>, vector<12x128xf32>
      %c0_11 = arith.constant 0 : index
      %c0_12 = arith.constant 0 : index
      %14 = vector.load %arg4[%c0_11, %c0_12] : memref<1x128xf32, #tpu.memory_space<vmem>>, vector<1x128xf32>
      %15 = vector.broadcast %14 : vector<1x128xf32> to vector<12x128xf32>
      %16 = arith.addf %13, %15 : vector<12x128xf32>
      %cst_13 = arith.constant 0.000000e+00 : f32
      %17 = vector.broadcast %cst_13 : f32 to vector<12x128xf32>
      %18 = arith.maximumf %16, %17 : vector<12x128xf32>
      %19 = arith.truncf %18 : vector<12x128xf32> to vector<12x128xbf16>
      %c0_14 = arith.constant 0 : index
      %c0_15 = arith.constant 0 : index
      %20 = vector.load %arg5[%c0_14, %c0_15] : memref<128x128xbf16, #tpu.memory_space<vmem>>, vector<128x128xbf16>
      %cst_16 = arith.constant dense<0.000000e+00> : vector<12x128xf32>
      %21 = tpu.matmul %19, %20, %cst_16 {dimension_numbers = #tpu.dot_dimension_numbers<[1], [0], [0], [1], [0, 0, 1, 1], [], []>} : vector<12x128xbf16>, vector<128x128xbf16>, vector<12x128xf32> -> vector<12x128xf32>
      %c0_17 = arith.constant 0 : index
      %c0_18 = arith.constant 0 : index
      %22 = vector.load %arg6[%c0_17, %c0_18] : memref<1x128xf32, #tpu.memory_space<vmem>>, vector<1x128xf32>
      %23 = vector.broadcast %22 : vector<1x128xf32> to vector<12x128xf32>
      %24 = arith.addf %21, %23 : vector<12x128xf32>
      %cst_19 = arith.constant 0.000000e+00 : f32
      %25 = vector.broadcast %cst_19 : f32 to vector<12x128xf32>
      %26 = arith.maximumf %24, %25 : vector<12x128xf32>
      %c0_20 = arith.constant 0 : index
      %c0_21 = arith.constant 0 : index
      %27 = vector.load %arg7[%c0_20, %c0_21] : memref<12x128xf32, #tpu.memory_space<vmem>>, vector<12x128xf32>
      tpu.vector_store %arg7[%c0_20, %c0_21], %26 {strides = array<i32>} : memref<12x128xf32, #tpu.memory_space<vmem>>, vector<12x128xf32>,
    } else {
    }
    return
  }
  func.func @transform_0(%arg0: i32, %arg1: i32) -> (i32, i32) {
    %c0_i32 = arith.constant 0 : i32
    return %arg0, %arg1 : i32, i32
  }
  func.func @transform_1(%arg0: i32, %arg1: i32) -> (i32, i32) {
    %c0_i32 = arith.constant 0 : i32
    %c0_i32_0 = arith.constant 0 : i32
    return %arg1, %c0_i32 : i32, i32
  }
  func.func @transform_2(%arg0: i32, %arg1: i32) -> (i32, i32) {
    %c0_i32 = arith.constant 0 : i32
    %c0_i32_0 = arith.constant 0 : i32
    %c0_i32_1 = arith.constant 0 : i32
    return %c0_i32, %c0_i32_0 : i32, i32
  }
  func.func @transform_3(%arg0: i32, %arg1: i32) -> (i32, i32) {
    %c0_i32 = arith.constant 0 : i32
    %c0_i32_0 = arith.constant 0 : i32
    %c0_i32_1 = arith.constant 0 : i32
    return %c0_i32, %c0_i32_0 : i32, i32
  }
  func.func @transform_4(%arg0: i32, %arg1: i32) -> (i32, i32) {
    %c0_i32 = arith.constant 0 : i32
    %c0_i32_0 = arith.constant 0 : i32
    %c0_i32_1 = arith.constant 0 : i32
    return %c0_i32, %c0_i32_0 : i32, i32
  }
  func.func @transform_5(%arg0: i32, %arg1: i32) -> (i32, i32) {
    %c0_i32 = arith.constant 0 : i32
    %c0_i32_0 = arith.constant 0 : i32
    return %arg0, %c0_i32 : i32, i32
  }
}

</mosaic_0001>

<llo_original>
// kernel: tpu_custom_call.1
$region0: #{tpu_custom_call.1}
  #allocation0 [shape = 'u32[]', space=smem, size = 0x4, offset = 0x4, fixed_abs, tag = 'smem constant byte address 0x4 - core index']
  #allocation1 [shape = 'u32[72,128]{1,0:T(1,128)}', space=vmem, size = 0x9000, scoped, tag = 'internal scratch']
  %s0 = inlined_call_operand.hbm [shape: f32[12,256], index: 0, kind: input, shape index: {}]
  %s1 = inlined_call_operand.hbm [shape: bf16[256,128], index: 1, kind: input, shape index: {}]
  %s2 = inlined_call_operand.vmem [shape: f32[1,128], index: 2, kind: input, shape index: {}]
  %s3 = inlined_call_operand.hbm [shape: bf16[128,128], index: 3, kind: input, shape index: {}]
  %s4 = inlined_call_operand.vmem [shape: f32[1,128], index: 4, kind: input, shape index: {}]
  %s5 = inlined_call_operand.hbm [shape: f32[12,128], index: 5, kind: output, shape index: {}]
  %s6 = sld [smem:[#allocation0]]
  $region73: #{tpu_custom_call.1} parent=0
    _
  %s8 = ssub.s32 1, %s6
  %s9 = scalar_select 0, %s8, %s6
  $region1: #{tpu_custom_call.1} parent=0
    #allocation2 [shape = 'u8[16384]{0}', space=vmem, size = 0x4000, scoped, tag = 'input window, operand 0']
    #allocation3 [shape = 's32[2]{0}', space=sflag, size = 0x8, scoped, tag = 'scoped memory for tpu_custom_call.1']
    #allocation4 [shape = 's32[2]{0}', space=sflag, size = 0x8, scoped, tag = 'scoped memory for tpu_custom_call.1']
    #allocation5 [shape = 'u8[65536]{0}', space=vmem, size = 0x10000, scoped, tag = 'input window, operand 1']
    #allocation6 [shape = 's32[2]{0}', space=sflag, size = 0x8, scoped, tag = 'scoped memory for tpu_custom_call.1']
    #allocation7 [shape = 'u8[32768]{0}', space=vmem, size = 0x8000, scoped, tag = 'input window, operand 3, single buffered']
    #allocation8 [shape = 'u8[8192]{0}', space=vmem, size = 0x2000, scoped, tag = 'output window, operand 0, single buffered']
    %10 = vsyncpa [#allocation3], 0
    %s11 = scalar_lea.sflag [#allocation3], 1
    %12 = vsyncpa %s11, 0
    %13 = vsyncpa [#allocation6], 0
    %s14 = scalar_lea.sflag [#allocation6], 1
    %15 = vsyncpa %s14, 0
    %16 = vsyncpa [#allocation4], 0
    loop: start=0, step=1, limit=4
    $region2: #{tpu_custom_call.1} parent=1 // loop_pre_header
      _
    $region3: #{tpu_custom_call.1} parent=1 // loop_header
      %s18 = sphi 0, %s22
      %p19 = scmp.ge.s32.totalorder %s18, 4
      %s25 = sphi 0, %s37
      %s26 = sphi 0, %s33
      %s27 = sphi 0, %s25
      %s28 = sphi 0, %s26
      %s29 = sphi 0, %s27
      %s30 = sphi 0, %s28
      %s42 = sphi 0, %s44
      %s45 = sphi 0, %s42
      %s46 = sphi 0, %s45
      %s62 = sphi 0, %s46
      %s68 = sphi 0, %s70
      %s71 = sphi 0, %s68
      %s72 = sphi 0, %s71
      %s88 = sphi 0, %s72
      %s92 = sphi 0, %s92
      %s94 = sphi 0, %s92
      %s95 = sphi 0, %s94
      %s109 = sphi 0, %s95
      %s113 = sphi 0, %s113
      %s115 = sphi 0, %s113
      %s116 = sphi 0, %s115
      %s130 = sphi 0, %s116
      %s134 = sphi 0, %s134
      %s136 = sphi 0, %s134
      %s137 = sphi 0, %s136
      %s151 = sphi 0, %s137
      %s157 = sphi 0, %s159
      %s160 = sphi 0, %s157
      %s161 = sphi 0, %s160
      %s177 = sphi 0, %s161
    $region4: #{tpu_custom_call.1} parent=1 // loop_header_branch
      %21 = sbr.rel (%p19) target = $region8
    $region5: #{tpu_custom_call.1} parent=1 // loop_body
      %s23 = ssub.s32 %s18, 1
      %s24 = ssub.s32 %s18, 2
      %s31 = sadd.s32 1, %s26
      %p32 = scmp.ge.s32.totalorder %s31, 2
      %s33 = scalar_select %p32, 0, %s31
      %s34 = sadd.s32 1, %s25
      %s35 = scalar_select %p32, %s34, %s25
      %p36 = scmp.ge.s32.totalorder %s35, 1
      %s37 = scalar_select %p36, 0, %s35
      %s38 = ssub.s32 %s25, %s37
      %s39 = ssub.s32 %s26, %s33
      %s40 = sor.u32 %s38, %s39
      %p41 = scmp.eq.s32.totalorder %s40, 0
      %s43 = sadd.s32 %s42, 1
      %s44 = scalar_select %p41, %s42, %s43
      %p47 = pneg %p41
      %p48 = scmp.eq.s32.totalorder %s18, 1
      %p49 = por %p47, %p48
      %p50 = scmp.ne.s32.totalorder %s42, %s45
      %p51 = scmp.eq.s32.totalorder %s18, 0
      %p52 = por %p50, %p51
      %p53 = scmp.ne.s32.totalorder %s42, %s45
      %p54 = scmp.eq.s32.totalorder %s23, 1
      %p55 = por %p53, %p54
      %p56 = scmp.ne.s32.totalorder %s45, %s46
      %p57 = scmp.eq.s32.totalorder %s23, 0
      %p58 = por %p56, %p57
      %p59 = scmp.ne.s32.totalorder %s45, %s46
      %p60 = scmp.eq.s32.totalorder %s24, 1
      %p61 = por %p59, %p60
      %p63 = scmp.ne.s32.totalorder %s46, %s62
      %p64 = scmp.eq.s32.totalorder %s24, 0
      %p65 = por %p63, %p64
      %s66 = ssub.s32 %s26, %s33
      %p67 = scmp.eq.s32.totalorder %s66, 0
      %s69 = sadd.s32 %s68, 1
      %s70 = scalar_select %p67, %s68, %s69
      %p73 = pneg %p67
      %p74 = scmp.eq.s32.totalorder %s18, 1
      %p75 = por %p73, %p74
      %p76 = scmp.ne.s32.totalorder %s68, %s71
      %p77 = scmp.eq.s32.totalorder %s18, 0
      %p78 = por %p76, %p77
      %p79 = scmp.ne.s32.totalorder %s68, %s71
      %p80 = scmp.eq.s32.totalorder %s23, 1
      %p81 = por %p79, %p80
      %p82 = scmp.ne.s32.totalorder %s71, %s72
      %p83 = scmp.eq.s32.totalorder %s23, 0
      %p84 = por %p82, %p83
      %p85 = scmp.ne.s32.totalorder %s71, %s72
      %p86 = scmp.eq.s32.totalorder %s24, 1
      %p87 = por %p85, %p86
      %p89 = scmp.ne.s32.totalorder %s72, %s88
      %p90 = scmp.eq.s32.totalorder %s24, 0
      %p91 = por %p89, %p90
      %s93 = sadd.s32 %s92, 1
      %p96 = scmp.eq.s32.totalorder %s18, 1
      %p97 = scmp.ne.s32.totalorder %s92, %s94
      %p98 = scmp.eq.s32.totalorder %s18, 0
      %p99 = por %p97, %p98
      %p100 = scmp.ne.s32.totalorder %s92, %s94
      %p101 = scmp.eq.s32.totalorder %s23, 1
      %p102 = por %p100, %p101
      %p103 = scmp.ne.s32.totalorder %s94, %s95
      %p104 = scmp.eq.s32.totalorder %s23, 0
      %p105 = por %p103, %p104
      %p106 = scmp.ne.s32.totalorder %s94, %s95
      %p107 = scmp.eq.s32.totalorder %s24, 1
      %p108 = por %p106, %p107
      %p110 = scmp.ne.s32.totalorder %s95, %s109
      %p111 = scmp.eq.s32.totalorder %s24, 0
      %p112 = por %p110, %p111
      %s114 = sadd.s32 %s113, 1
      %p117 = scmp.eq.s32.totalorder %s18, 1
      %p118 = scmp.ne.s32.totalorder %s113, %s115
      %p119 = scmp.eq.s32.totalorder %s18, 0
      %p120 = por %p118, %p119
      %p121 = scmp.ne.s32.totalorder %s113, %s115
      %p122 = scmp.eq.s32.totalorder %s23, 1
      %p123 = por %p121, %p122
      %p124 = scmp.ne.s32.totalorder %s115, %s116
      %p125 = scmp.eq.s32.totalorder %s23, 0
      %p126 = por %p124, %p125
      %p127 = scmp.ne.s32.totalorder %s115, %s116
      %p128 = scmp.eq.s32.totalorder %s24, 1
      %p129 = por %p127, %p128
      %p131 = scmp.ne.s32.totalorder %s116, %s130
      %p132 = scmp.eq.s32.totalorder %s24, 0
      %p133 = por %p131, %p132
      %s135 = sadd.s32 %s134, 1
      %p138 = scmp.eq.s32.totalorder %s18, 1
      %p139 = scmp.ne.s32.totalorder %s134, %s136
      %p140 = scmp.eq.s32.totalorder %s18, 0
      %p141 = por %p139, %p140
      %p142 = scmp.ne.s32.totalorder %s134, %s136
      %p143 = scmp.eq.s32.totalorder %s23, 1
      %p144 = por %p142, %p143
      %p145 = scmp.ne.s32.totalorder %s136, %s137
      %p146 = scmp.eq.s32.totalorder %s23, 0
      %p147 = por %p145, %p146
      %p148 = scmp.ne.s32.totalorder %s136, %s137
      %p149 = scmp.eq.s32.totalorder %s24, 1
      %p150 = por %p148, %p149
      %p152 = scmp.ne.s32.totalorder %s137, %s151
      %p153 = scmp.eq.s32.totalorder %s24, 0
      %p154 = por %p152, %p153
      %s155 = ssub.s32 %s25, %s37
      %p156 = scmp.eq.s32.totalorder %s155, 0
      %s158 = sadd.s32 %s157, 1
      %s159 = scalar_select %p156, %s157, %s158
      %p162 = pneg %p156
      %p163 = scmp.eq.s32.totalorder %s18, 1
      %p164 = por %p162, %p163
      %p165 = scmp.ne.s32.totalorder %s157, %s160
      %p166 = scmp.eq.s32.totalorder %s18, 0
      %p167 = por %p165, %p166
      %p168 = scmp.ne.s32.totalorder %s157, %s160
      %p169 = scmp.eq.s32.totalorder %s23, 1
      %p170 = por %p168, %p169
      %p171 = scmp.ne.s32.totalorder %s160, %s161
      %p172 = scmp.eq.s32.totalorder %s23, 0
      %p173 = por %p171, %p172
      %p174 = scmp.ne.s32.totalorder %s160, %s161
      %p175 = scmp.eq.s32.totalorder %s24, 1
      %p176 = por %p174, %p175
      %p178 = scmp.ne.s32.totalorder %s161, %s177
      %p179 = scmp.eq.s32.totalorder %s24, 0
      %p180 = por %p178, %p179
      %p181 = scmp.le.s32.totalorder 1, %s18
      %p182 = scmp.lt.s32.totalorder %s18, 3
      %p183 = pnand %p181, %p182
      %p184 = pneg %p183
      // Predicated region
      $region9: #{tpu_custom_call.1} parent=5 // pred_check
        _
      $region10: #{tpu_custom_call.1} parent=5 // pred_check_branch
        %186 = sbr.rel (%p183) target = $region12
      $region11: #{tpu_custom_call.1} parent=5 // pred_region
        %s187 = ssub.s32 %s18, 1
        // Predicated region
        $region13: #{tpu_custom_call.1} parent=11 // pred_check
          %p188 = pneg %p105
        $region14: #{tpu_custom_call.1} parent=11 // pred_check_branch
          %190 = sbr.rel (%p188) target = $region16
        $region15: #{tpu_custom_call.1} parent=11 // pred_region
          _
        $region16: #{tpu_custom_call.1} parent=11 // pred_fallthru
          _
        // Predicated region
        $region17: #{tpu_custom_call.1} parent=11 // pred_check
          %p191 = pneg %p126
        $region18: #{tpu_custom_call.1} parent=11 // pred_check_branch
          %193 = sbr.rel (%p191) target = $region20
        $region19: #{tpu_custom_call.1} parent=11 // pred_region
          %195 = vsyncadd [#allocation6], 0
          %s196 = sshll.u32 %s3, 4
          %s197 = int_to_ptr.hbm [resolvable:$true] %s196
          %s198 = sshll.u32 [#allocation7], 4
          %s199 = int_to_ptr.vmem [resolvable:$true] %s198
          %204 = dma.hbm_to_vmem [thread:$0]  %s197, 1024, %s199, [#allocation6], 64, 64, 4
        $region20: #{tpu_custom_call.1} parent=11 // pred_fallthru
          _
        // Predicated region
        $region21: #{tpu_custom_call.1} parent=11 // pred_check
          %p205 = pneg %p147
        $region22: #{tpu_custom_call.1} parent=11 // pred_check_branch
          %207 = sbr.rel (%p205) target = $region24
        $region23: #{tpu_custom_call.1} parent=11 // pred_region
          _
        $region24: #{tpu_custom_call.1} parent=11 // pred_fallthru
          _
      $region12: #{tpu_custom_call.1} parent=5 // pred_fallthru
        _
      %p208 = scmp.lt.s32.totalorder %s18, 2
      // Predicated region
      $region25: #{tpu_custom_call.1} parent=5 // pred_check
        %p209 = pneg %p208
      $region26: #{tpu_custom_call.1} parent=5 // pred_check_branch
        %211 = sbr.rel (%p209) target = $region28
      $region27: #{tpu_custom_call.1} parent=5 // pred_region
        // Predicated region
        $region29: #{tpu_custom_call.1} parent=27 // pred_check
          %p212 = pneg %p52
        $region30: #{tpu_custom_call.1} parent=27 // pred_check_branch
          %214 = sbr.rel (%p212) target = $region32
        $region31: #{tpu_custom_call.1} parent=27 // pred_region
          %s215 = sand.u32 %s42, 1
          %s216 = scalar_lea.sflag [#allocation3], %s215
          %s217 = sand.u32 %s42, 1
          %s218 = smul.addr %s217, 16
          %s219 = scalar_lea.vmem [#allocation2], %s218
          %s220 = smul.u32 2, %s25
          %222 = vsyncadd %s216, 0
          %s223 = smul.addr %s220, 2
          %s224 = sadd.s32 %s26, %s223
          %s225 = smul.addr %s224, 8
          %s226 = scalar_lea.hbm %s0, %s225
          %s227 = sshll.u32 %s226, 4
          %s228 = int_to_ptr.hbm [resolvable:$true] %s227
          %s229 = sshll.u32 %s219, 4
          %s230 = int_to_ptr.vmem [resolvable:$true] %s229
          %235 = dma.hbm_to_vmem [thread:$0]  %s228, 256, %s230, %s216, 256, 128, 8
        $region32: #{tpu_custom_call.1} parent=27 // pred_fallthru
          _
        // Predicated region
        $region33: #{tpu_custom_call.1} parent=27 // pred_check
          %p236 = pneg %p78
        $region34: #{tpu_custom_call.1} parent=27 // pred_check_branch
          %238 = sbr.rel (%p236) target = $region36
        $region35: #{tpu_custom_call.1} parent=27 // pred_region
          %s239 = sand.u32 %s18, 1
          %s240 = scalar_lea.sflag [#allocation6], %s239
          %s241 = sand.u32 %s68, 1
          %s242 = smul.addr %s241, 64
          %s243 = scalar_lea.vmem [#allocation5], %s242
          %s244 = smul.u32 16, %s26
          %246 = vsyncadd %s240, 0
          %s247 = smul.addr %s244, 4
          %s248 = scalar_lea.hbm %s1, %s247
          %s249 = sshll.u32 %s248, 4
          %s250 = int_to_ptr.hbm [resolvable:$true] %s249
          %s251 = sshll.u32 %s243, 4
          %s252 = int_to_ptr.vmem [resolvable:$true] %s251
          %257 = dma.hbm_to_vmem [thread:$0]  %s250, 1024, %s252, %s240, 64, 64, 4
        $region36: #{tpu_custom_call.1} parent=27 // pred_fallthru
          _
      $region28: #{tpu_custom_call.1} parent=5 // pred_fallthru
        _
      %p258 = scmp.le.s32.totalorder 1, %s18
      %p259 = scmp.lt.s32.totalorder %s18, 3
      %p260 = pnand %p258, %p259
      %p261 = pneg %p260
      // Predicated region
      $region37: #{tpu_custom_call.1} parent=5 // pred_check
        _
      $region38: #{tpu_custom_call.1} parent=5 // pred_check_branch
        %263 = sbr.rel (%p260) target = $region40
      $region39: #{tpu_custom_call.1} parent=5 // pred_region
        %s264 = ssub.s32 %s18, 1
        %s265 = sand.u32 %s45, 1
        %s266 = scalar_lea.sflag [#allocation3], %s265
        %s267 = sand.u32 %s45, 1
        %s268 = smul.addr %s267, 16
        %s269 = scalar_lea.vmem [#allocation2], %s268
        // Predicated region
        $region41: #{tpu_custom_call.1} parent=39 // pred_check
          %p270 = pneg %p58
        $region42: #{tpu_custom_call.1} parent=39 // pred_check_branch
          %272 = sbr.rel (%p270) target = $region44
        $region43: #{tpu_custom_call.1} parent=39 // pred_region
          %274 = dma.done %s266, 256
        $region44: #{tpu_custom_call.1} parent=39 // pred_fallthru
          _
        %s275 = sand.u32 %s23, 1
        %s276 = scalar_lea.sflag [#allocation6], %s275
        %s277 = sand.u32 %s71, 1
        %s278 = smul.addr %s277, 64
        %s279 = scalar_lea.vmem [#allocation5], %s278
        // Predicated region
        $region45: #{tpu_custom_call.1} parent=39 // pred_check
          %p280 = pneg %p84
        $region46: #{tpu_custom_call.1} parent=39 // pred_check_branch
          %282 = sbr.rel (%p280) target = $region48
        $region47: #{tpu_custom_call.1} parent=39 // pred_region
          %284 = dma.done %s276, 1024
        $region48: #{tpu_custom_call.1} parent=39 // pred_fallthru
          _
        // Predicated region
        $region49: #{tpu_custom_call.1} parent=39 // pred_check
          %p285 = pneg %p126
        $region50: #{tpu_custom_call.1} parent=39 // pred_check_branch
          %287 = sbr.rel (%p285) target = $region52
        $region51: #{tpu_custom_call.1} parent=39 // pred_region
          %289 = dma.done [#allocation6], 1024
        $region52: #{tpu_custom_call.1} parent=39 // pred_fallthru
          _
        %s290 = sand.u32 %s45, 1
        %s291 = scalar_lea.sflag [#allocation3], %s290
        %s292 = sand.u32 %s45, 1
        %s293 = smul.addr %s292, 16
        %s294 = scalar_lea.vmem [#allocation2], %s293
        %p295 = pneg %p58
        %p296 = pneg %p55
        %s297 = sand.u32 %s23, 1
        %s298 = scalar_lea.sflag [#allocation6], %s297
        %s299 = sand.u32 %s71, 1
        %s300 = smul.addr %s299, 64
        %s301 = scalar_lea.vmem [#allocation5], %s300
        %p302 = pneg %p84
        %p303 = pneg %p81
        %p304 = pneg %p105
        %p305 = pneg %p102
        %p306 = pneg %p126
        %p307 = pneg %p123
        %p308 = pneg %p147
        %p309 = pneg %p144
        %p310 = pneg %p173
        %p311 = pneg %p170
        %s312 = smul.u32 2, %s27
        %s313 = smul.u32 16, %s28
        %s314 = smul.u32 2, %s27
        %p315 = scmp.eq.s32.totalorder %s28, 0
        // Predicated region
        $region53: #{tpu_custom_call.1} parent=39 // pred_check
          %p316 = pneg %p315
        $region54: #{tpu_custom_call.1} parent=39 // pred_check_branch
          %318 = sbr.rel (%p316) target = $region56
        $region55: #{tpu_custom_call.1} parent=39 // pred_region
          %319 = vst [vmem:[#allocation8] sm:$0xff] 0.0
          %320 = vst [vmem:[#allocation8 + $0x8] sm:$0xf] 0.0
        $region56: #{tpu_custom_call.1} parent=39 // pred_fallthru
          _
        %v321 = vld [vmem:[#allocation8] sm:$0xff]
        %v322 = vld [vmem:[#allocation8 + $0x8] sm:$0xf]
        %v323 = vld [vmem:[%s269] sm:$0xff]
        %v324 = vld [vmem:[%s269 + $0x8] sm:$0xf]
        %v325 = vpack.c.bf16 %v324, %v323
        %v326 = vld [vmem:[%s279] sm:$0xf]
        %v327 = vld [vmem:[%s279 + $0x4] sm:$0xf]
        %v328 = vld [vmem:[%s279 + $0x8] sm:$0xf]
        %v329 = vld [vmem:[%s279 + $0xc] sm:$0xf]
        %v330 = vld [vmem:[%s279 + $0x10] sm:$0xf]
        %v331 = vld [vmem:[%s279 + $0x14] sm:$0xf]
        %v332 = vld [vmem:[%s279 + $0x18] sm:$0xf]
        %v333 = vld [vmem:[%s279 + $0x1c] sm:$0xf]
        %v334 = vld [vmem:[%s279 + $0x20] sm:$0xf]
        %v335 = vld [vmem:[%s279 + $0x24] sm:$0xf]
        %v336 = vld [vmem:[%s279 + $0x28] sm:$0xf]
        %v337 = vld [vmem:[%s279 + $0x2c] sm:$0xf]
        %v338 = vld [vmem:[%s279 + $0x30] sm:$0xf]
        %v339 = vld [vmem:[%s279 + $0x34] sm:$0xf]
        %v340 = vld [vmem:[%s279 + $0x38] sm:$0xf]
        %v341 = vld [vmem:[%s279 + $0x3c] sm:$0xf]
        %v358 = vunpack.c.l.b16 %v326
        %v359 = vunpack.c.l.b16 %v327
        %v360 = vunpack.c.l.b16 %v328
        %v361 = vunpack.c.l.b16 %v329
        %v362 = vunpack.c.l.b16 %v330
        %v363 = vunpack.c.l.b16 %v331
        %v364 = vunpack.c.l.b16 %v332
        %v365 = vunpack.c.l.b16 %v333
        %v366 = vunpack.c.l.b16 %v334
        %v367 = vunpack.c.l.b16 %v335
        %v368 = vunpack.c.l.b16 %v336
        %v369 = vunpack.c.l.b16 %v337
        %v370 = vunpack.c.l.b16 %v338
        %v371 = vunpack.c.l.b16 %v339
        %v372 = vunpack.c.l.b16 %v340
        %v373 = vunpack.c.l.b16 %v341
        %v374 = vpack.c.b16 %v359, %v358
        %v375 = vpack.c.b16 %v361, %v360
        %v376 = vpack.c.b16 %v363, %v362
        %v377 = vpack.c.b16 %v365, %v364
        %v378 = vpack.c.b16 %v367, %v366
        %v379 = vpack.c.b16 %v369, %v368
        %v380 = vpack.c.b16 %v371, %v370
        %v381 = vpack.c.b16 %v373, %v372
        %390 = vmatpush.bf16.msra.mxu0 %v381
        %391 = vmatpush.bf16.msra.mxu0 %v380
        %392 = vmatpush.bf16.msra.mxu0 %v379
        %393 = vmatpush.bf16.msra.mxu0 %v378
        %394 = vmatpush.bf16.msra.mxu0 %v377
        %395 = vmatpush.bf16.msra.mxu0 %v376
        %396 = vmatpush.bf16.msra.mxu0 %v375
        %397 = vmatpush.bf16.msra.mxu0 %v374
        %398 = vmatmul.bf16.gmra.mxu0 %v325
        %v399 = vpop.f32.mrf.mxu0
        %v400 = vadd.f32 0.0, %v399
        %v401 = vpop.f32.mrf.mxu0
        %v402 = vadd.f32 0.0, %v401
        %403 = vdwg.mxu0
        %v404 = vadd.f32 %v321, %v400
        %v405 = vadd.f32 %v322, %v402
        %406 = vst [vmem:[#allocation8] sm:$0xff] %v404
        %407 = vst [vmem:[#allocation8 + $0x8] sm:$0xf] %v405
        %p408 = scmp.eq.s32.totalorder %s28, 1
        // Predicated region
        $region57: #{tpu_custom_call.1} parent=39 // pred_check
          %p409 = pneg %p408
        $region58: #{tpu_custom_call.1} parent=39 // pred_check_branch
          %411 = sbr.rel (%p409) target = $region60
        $region59: #{tpu_custom_call.1} parent=39 // pred_region
          %v412 = vld [vmem:[#allocation8] sm:$0xff]
          %v413 = vld [vmem:[#allocation8 + $0x8] sm:$0xf]
          %v414 = vld [vmem:[%s2] sm:$0x1]
          %v416 = vperm.slane %v414, 0
          %v418 = vadd.f32 %v412, %v416
          %v419 = vadd.f32 %v413, %v416
          %v420 = vmax.f32 %v418, 0.0
          %v421 = vmax.f32 %v419, 0.0
          %v422 = vpack.c.bf16 %v421, %v420
          %v423 = vld [vmem:[#allocation7] sm:$0xf]
          %v424 = vld [vmem:[#allocation7 + $0x4] sm:$0xf]
          %v425 = vld [vmem:[#allocation7 + $0x8] sm:$0xf]
          %v426 = vld [vmem:[#allocation7 + $0xc] sm:$0xf]
          %v427 = vld [vmem:[#allocation7 + $0x10] sm:$0xf]
          %v428 = vld [vmem:[#allocation7 + $0x14] sm:$0xf]
          %v429 = vld [vmem:[#allocation7 + $0x18] sm:$0xf]
          %v430 = vld [vmem:[#allocation7 + $0x1c] sm:$0xf]
          %v431 = vld [vmem:[#allocation7 + $0x20] sm:$0xf]
          %v432 = vld [vmem:[#allocation7 + $0x24] sm:$0xf]
          %v433 = vld [vmem:[#allocation7 + $0x28] sm:$0xf]
          %v434 = vld [vmem:[#allocation7 + $0x2c] sm:$0xf]
          %v435 = vld [vmem:[#allocation7 + $0x30] sm:$0xf]
          %v436 = vld [vmem:[#allocation7 + $0x34] sm:$0xf]
          %v437 = vld [vmem:[#allocation7 + $0x38] sm:$0xf]
          %v438 = vld [vmem:[#allocation7 + $0x3c] sm:$0xf]
          %v439 = vld [vmem:[%s4] sm:$0x1]
          %v441 = vperm.slane %v439, 0
          %v459 = vunpack.c.l.b16 %v423
          %v460 = vunpack.c.l.b16 %v424
          %v461 = vunpack.c.l.b16 %v425
          %v462 = vunpack.c.l.b16 %v426
          %v463 = vunpack.c.l.b16 %v427
          %v464 = vunpack.c.l.b16 %v428
          %v465 = vunpack.c.l.b16 %v429
          %v466 = vunpack.c.l.b16 %v430
          %v467 = vunpack.c.l.b16 %v431
          %v468 = vunpack.c.l.b16 %v432
          %v469 = vunpack.c.l.b16 %v433
          %v470 = vunpack.c.l.b16 %v434
          %v471 = vunpack.c.l.b16 %v435
          %v472 = vunpack.c.l.b16 %v436
          %v473 = vunpack.c.l.b16 %v437
          %v474 = vunpack.c.l.b16 %v438
          %v475 = vpack.c.b16 %v460, %v459
          %v476 = vpack.c.b16 %v462, %v461
          %v477 = vpack.c.b16 %v464, %v463
          %v478 = vpack.c.b16 %v466, %v465
          %v479 = vpack.c.b16 %v468, %v467
          %v480 = vpack.c.b16 %v470, %v469
          %v481 = vpack.c.b16 %v472, %v471
          %v482 = vpack.c.b16 %v474, %v473
          %491 = vmatpush.bf16.msra.mxu0 %v482
          %492 = vmatpush.bf16.msra.mxu0 %v481
          %493 = vmatpush.bf16.msra.mxu0 %v480
          %494 = vmatpush.bf16.msra.mxu0 %v479
          %495 = vmatpush.bf16.msra.mxu0 %v478
          %496 = vmatpush.bf16.msra.mxu0 %v477
          %497 = vmatpush.bf16.msra.mxu0 %v476
          %498 = vmatpush.bf16.msra.mxu0 %v475
          %499 = vmatmul.bf16.gmra.mxu0 %v422
          %v500 = vpop.f32.mrf.mxu0
          %v501 = vadd.f32 %v441, %v500
          %v502 = vpop.f32.mrf.mxu0
          %v503 = vadd.f32 %v441, %v502
          %504 = vdwg.mxu0
          %v505 = vmax.f32 %v501, 0.0
          %v506 = vmax.f32 %v503, 0.0
          %507 = vst [vmem:[#allocation8] sm:$0xff] %v505
          %508 = vst [vmem:[#allocation8 + $0x8] sm:$0xf] %v506
        $region60: #{tpu_custom_call.1} parent=39 // pred_fallthru
          _
        // Predicated region
        $region61: #{tpu_custom_call.1} parent=39 // pred_check
          %p509 = pneg %p170
        $region62: #{tpu_custom_call.1} parent=39 // pred_check_branch
          %511 = sbr.rel (%p509) target = $region64
        $region63: #{tpu_custom_call.1} parent=39 // pred_region
          %s512 = smul.u32 2, %s27
          %514 = vsyncadd [#allocation4], 0
          %s515 = smul.addr %s512, 8
          %s516 = scalar_lea.hbm %s5, %s515
          %s517 = sshll.u32 [#allocation8], 4
          %s518 = int_to_ptr.vmem [resolvable:$true] %s517
          %s519 = sshll.u32 %s516, 4
          %s520 = int_to_ptr.hbm [resolvable:$true] %s519
          %525 = dma.vmem_to_hbm [thread:$0]  %s518, 256, %s520, [#allocation4], 128, 128, 8
        $region64: #{tpu_custom_call.1} parent=39 // pred_fallthru
          _
        // Predicated region
        $region65: #{tpu_custom_call.1} parent=39 // pred_check
          %p526 = pneg %p170
        $region66: #{tpu_custom_call.1} parent=39 // pred_check_branch
          %528 = sbr.rel (%p526) target = $region68
        $region67: #{tpu_custom_call.1} parent=39 // pred_region
          %530 = dma.done [#allocation4], 256
        $region68: #{tpu_custom_call.1} parent=39 // pred_fallthru
          _
      $region40: #{tpu_custom_call.1} parent=5 // pred_fallthru
        _
      %p531 = scmp.le.s32.totalorder 2, %s18
      // Predicated region
      $region69: #{tpu_custom_call.1} parent=5 // pred_check
        %p532 = pneg %p531
      $region70: #{tpu_custom_call.1} parent=5 // pred_check_branch
        %534 = sbr.rel (%p532) target = $region72
      $region71: #{tpu_custom_call.1} parent=5 // pred_region
        %s535 = ssub.s32 %s18, 2
      $region72: #{tpu_custom_call.1} parent=5 // pred_fallthru
        _
    $region6: #{tpu_custom_call.1} parent=1 // loop_footer
      %s22 = sadd.s32 1, %s18
    $region7: #{tpu_custom_call.1} parent=1 // loop_footer_branch
      %17 = sbr.rel target = $region3
    $region8: #{tpu_custom_call.1} parent=1 // loop_exit
      _
    %536 = vsyncpa [#allocation3], 1
    %s537 = scalar_lea.sflag [#allocation3], 1
    %538 = vsyncpa %s537, 1
    %539 = vsyncpa [#allocation6], 1
    %s540 = scalar_lea.sflag [#allocation6], 1
    %541 = vsyncpa %s540, 1
    %542 = vsyncpa [#allocation4], 1
    %s543 = scalar_lea.sflag [#allocation4], 1
    %544 = vsyncpa %s543, 1

</llo_original>
